<compile_context>
chip_gen: v7x
topology: tpu7x:2x2x1
jax: 0.10.0
libtpu: 0.0.40
codegen_flags: <defaults>
</compile_context>

<pallas_src>
import functools

import jax
import jax.numpy as jnp
from jax.experimental import pallas as pl
from jax.experimental.pallas import tpu as pltpu


def _make_kernel(compute_dtype):
    def kernel(state_ref, inp_ref, w_tr_ref, w_in_ref, b_ref, out_ref):
        # Cast MXU operands in-kernel (no extra XLA launch, no extra HBM pass).
        s = state_ref[...].astype(compute_dtype)
        x = inp_ref[...].astype(compute_dtype)
        wt = w_tr_ref[...].astype(compute_dtype)
        wi = w_in_ref[...].astype(compute_dtype)
        # Two small-K MXU passes, f32 accumulation.
        acc = jnp.dot(s, wt, preferred_element_type=jnp.float32)
        acc = acc + jnp.dot(x, wi, preferred_element_type=jnp.float32)
        # Bias broadcast-add: lands in the otherwise-idle VALU slot (free).
        acc = acc + b_ref[...]
        # nonlin == 'sigmoid' (module default). jax.nn.sigmoid's exp goes to
        # the EUP; for very large tiles on v6e one could hand-roll
        # exp(-x) + pl.reciprocal(1 + e, approx=True) — negligible here.
        out_ref[...] = jax.nn.sigmoid(acc).astype(out_ref.dtype)

    return kernel


def _pick_block(full, target, quantum):
    """Largest block <= target that is a multiple of `quantum` and divides
    `full`; falls back to the full extent (always a legal block shape)."""
    if full % quantum == 0:
        b = min(full, max(quantum, (target // quantum) * quantum))
        while b >= quantum:
            if full % b == 0:
                return b
            b -= quantum
    return full


def prepare_jordan_params(w_in, w_tr, b_tr, compute_dtype=jnp.float32):
    """One-time parameter prep (hoisted out of the per-step forward path).

    w_in, w_tr: (H, D_in) as nn.Linear stores them; b_tr: (H,).
    Returns (w_in_t, w_tr_t, b_row): weights transposed to (D_in, H) and cast
    to the MXU compute dtype; bias reshaped to a (1, H) f32 row.
    """
    return (
        jnp.asarray(w_in).T.astype(compute_dtype),
        jnp.asarray(w_tr).T.astype(compute_dtype),
        jnp.asarray(b_tr).reshape(1, -1).astype(jnp.float32),
    )


@functools.partial(
    jax.jit, static_argnames=("compute_dtype", "block_b", "block_h")
)
def jordan_cell(inp, state, w_in_t, w_tr_t, b_row, *,
                compute_dtype=jnp.float32, block_b=256, block_h=512):
    """inp, state: (B, D_in); w_*_t: (D_in, H); b_row: (1, H) f32.

    Returns sigmoid(state @ w_tr_t + b_row + inp @ w_in_t), shape (B, H).
    """
    B, D_in = inp.shape
    H = w_in_t.shape[1]

    bb = _pick_block(B, block_b, 8)      # batch tile (sublane quantum 8)
    bh = _pick_block(H, block_h, 128)    # hidden tile (lane quantum 128)
    grid = (B // bb, H // bh)

    kernel = _make_kernel(compute_dtype)

    return pl.pallas_call(
        kernel,
        out_shape=jax.ShapeDtypeStruct((B, H), inp.dtype),
        grid=grid,
        in_specs=[
            pl.BlockSpec((bb, D_in), lambda i, j: (i, 0)),   # state
            pl.BlockSpec((bb, D_in), lambda i, j: (i, 0)),   # inp
            pl.BlockSpec((D_in, bh), lambda i, j: (0, j)),   # W_tr^T (B-resident)
            pl.BlockSpec((D_in, bh), lambda i, j: (0, j)),   # W_in^T (B-resident)
            pl.BlockSpec((1, bh), lambda i, j: (0, j)),      # bias row
        ],
        out_specs=pl.BlockSpec((bb, bh), lambda i, j: (i, j)),
        compiler_params=pltpu.CompilerParams(
            # Both axes independent -> megacore sharding on v7x; harmless on
            # v5e/v6e. No reduction grid axis: K is contracted in-kernel.
            dimension_semantics=("parallel", "parallel"),
        ),
    )(state, inp, w_tr_t, w_in_t, b_row)


if __name__ == "__main__":
    # Small shapes consistent with the module: batch=8, input_dim=16, hidden_dim=32
    B, D_in, H = 8, 16, 32

    key = jax.random.PRNGKey(0)
    k_inp, k_state, k_win, k_wtr, k_btr = jax.random.split(key, 5)

    inp = jax.random.normal(k_inp, (B, D_in), dtype=jnp.float32)
    state = jax.random.normal(k_state, (B, D_in), dtype=jnp.float32)

    # Parameters as nn.Linear stores them: (H, D_in) weights, (H,) bias.
    w_in = jax.random.normal(k_win, (H, D_in), dtype=jnp.float32) * 0.1
    w_tr = jax.random.normal(k_wtr, (H, D_in), dtype=jnp.float32) * 0.1
    b_tr = jax.random.normal(k_btr, (H,), dtype=jnp.float32) * 0.1

    # Pure-JAX reference of the module's forward.
    ref = jax.nn.sigmoid(state @ w_tr.T + b_tr + inp @ w_in.T)

    # --- f32 path (bit-for-bit vs the PyTorch module's default dtype) ---
    w_in_t, w_tr_t, b_row = prepare_jordan_params(w_in, w_tr, b_tr,
                                                  compute_dtype=jnp.float32)
    out_f32 = jordan_cell(inp, state, w_in_t, w_tr_t, b_row,
                          compute_dtype=jnp.float32)
    out_f32 = jax.block_until_ready(out_f32)
    assert out_f32.shape == (B, H)
    assert jnp.allclose(out_f32, ref, atol=1e-5, rtol=1e-5)

    # --- bf16 MXU path (native matmul dtype; f32 accumulate + f32 epilogue) ---
    w_in_b, w_tr_b, b_row_b = prepare_jordan_params(w_in, w_tr, b_tr,
                                                    compute_dtype=jnp.bfloat16)
    out_bf16 = jordan_cell(inp, state, w_in_b, w_tr_b, b_row_b,
                           compute_dtype=jnp.bfloat16)
    out_bf16 = jax.block_until_ready(out_bf16)
    assert out_bf16.shape == (B, H)
    assert jnp.allclose(out_bf16, ref, atol=2e-2, rtol=2e-2)

    print("KERNEL_OK")
</pallas_src>

<mosaic_0001>
module attributes {stable_mosaic.version = 11 : i64} {
  func.func @kernel(%arg0: i32, %arg1: i32, %arg2: memref<8x16xf32, #tpu.memory_space<vmem>>, %arg3: memref<8x16xf32, #tpu.memory_space<vmem>>, %arg4: memref<16x32xf32, #tpu.memory_space<vmem>>, %arg5: memref<16x32xf32, #tpu.memory_space<vmem>>, %arg6: memref<1x32xf32, #tpu.memory_space<vmem>>, %arg7: memref<8x32xf32, #tpu.memory_space<vmem>>) attributes {dimension_semantics = [#tpu.dimension_semantics<parallel>, #tpu.dimension_semantics<parallel>], iteration_bounds = array<i64: 1, 1>, scalar_prefetch = 0 : i64, scratch_operands = 0 : i64, tpu.core_type = #tpu.core_type<tc>, window_params = [{transform_indices = @transform_0, window_bounds = array<i64: 8, 16>}, {transform_indices = @transform_1, window_bounds = array<i64: 8, 16>}, {transform_indices = @transform_2, window_bounds = array<i64: 16, 32>}, {transform_indices = @transform_3, window_bounds = array<i64: 16, 32>}, {transform_indices = @transform_4, window_bounds = array<i64: 1, 32>}, {transform_indices = @transform_5, window_bounds = array<i64: 8, 32>}]} {
    %c0 = arith.constant 0 : index
    %c0_0 = arith.constant 0 : index
    %0 = vector.load %arg2[%c0, %c0_0] : memref<8x16xf32, #tpu.memory_space<vmem>>, vector<8x16xf32>
    %c0_1 = arith.constant 0 : index
    %c0_2 = arith.constant 0 : index
    %1 = vector.load %arg3[%c0_1, %c0_2] : memref<8x16xf32, #tpu.memory_space<vmem>>, vector<8x16xf32>
    %c0_3 = arith.constant 0 : index
    %c0_4 = arith.constant 0 : index
    %2 = vector.load %arg4[%c0_3, %c0_4] : memref<16x32xf32, #tpu.memory_space<vmem>>, vector<16x32xf32>
    %c0_5 = arith.constant 0 : index
    %c0_6 = arith.constant 0 : index
    %3 = vector.load %arg5[%c0_5, %c0_6] : memref<16x32xf32, #tpu.memory_space<vmem>>, vector<16x32xf32>
    %cst = arith.constant dense<0.000000e+00> : vector<8x32xf32>
    %4 = tpu.matmul %0, %2, %cst {dimension_numbers = #tpu.dot_dimension_numbers<[1], [0], [0], [1], [0, 0, 1, 1], [], []>} : vector<8x16xf32>, vector<16x32xf32>, vector<8x32xf32> -> vector<8x32xf32>
    %cst_7 = arith.constant dense<0.000000e+00> : vector<8x32xf32>
    %5 = tpu.matmul %1, %3, %cst_7 {dimension_numbers = #tpu.dot_dimension_numbers<[1], [0], [0], [1], [0, 0, 1, 1], [], []>} : vector<8x16xf32>, vector<16x32xf32>, vector<8x32xf32> -> vector<8x32xf32>
    %6 = arith.addf %4, %5 : vector<8x32xf32>
    %c0_8 = arith.constant 0 : index
    %c0_9 = arith.constant 0 : index
    %7 = vector.load %arg6[%c0_8, %c0_9] : memref<1x32xf32, #tpu.memory_space<vmem>>, vector<1x32xf32>
    %8 = vector.broadcast %7 : vector<1x32xf32> to vector<8x32xf32>
    %9 = arith.addf %6, %8 : vector<8x32xf32>
    %10 = arith.negf %9 : vector<8x32xf32>
    %11 = math.exp %10 : vector<8x32xf32>
    %cst_10 = arith.constant 1.000000e+00 : f32
    %12 = vector.broadcast %cst_10 : f32 to vector<8x32xf32>
    %13 = arith.addf %12, %11 : vector<8x32xf32>
    %14 = arith.divf %12, %13 : vector<8x32xf32>
    %c0_11 = arith.constant 0 : index
    %c0_12 = arith.constant 0 : index
    %15 = vector.load %arg7[%c0_11, %c0_12] : memref<8x32xf32, #tpu.memory_space<vmem>>, vector<8x32xf32>
    tpu.vector_store %arg7[%c0_11, %c0_12], %14 {strides = array<i32>} : memref<8x32xf32, #tpu.memory_space<vmem>>, vector<8x32xf32>,
    return
  }
  func.func @transform_0(%arg0: i32, %arg1: i32) -> (i32, i32) {
    %c0_i32 = arith.constant 0 : i32
    %c0_i32_0 = arith.constant 0 : i32
    return %arg0, %c0_i32 : i32, i32
  }
  func.func @transform_1(%arg0: i32, %arg1: i32) -> (i32, i32) {
    %c0_i32 = arith.constant 0 : i32
    %c0_i32_0 = arith.constant 0 : i32
    return %arg0, %c0_i32 : i32, i32
  }
  func.func @transform_2(%arg0: i32, %arg1: i32) -> (i32, i32) {
    %c0_i32 = arith.constant 0 : i32
    %c0_i32_0 = arith.constant 0 : i32
    return %c0_i32, %arg1 : i32, i32
  }
  func.func @transform_3(%arg0: i32, %arg1: i32) -> (i32, i32) {
    %c0_i32 = arith.constant 0 : i32
    %c0_i32_0 = arith.constant 0 : i32
    return %c0_i32, %arg1 : i32, i32
  }
  func.func @transform_4(%arg0: i32, %arg1: i32) -> (i32, i32) {
    %c0_i32 = arith.constant 0 : i32
    %c0_i32_0 = arith.constant 0 : i32
    return %c0_i32, %arg1 : i32, i32
  }
  func.func @transform_5(%arg0: i32, %arg1: i32) -> (i32, i32) {
    %c0_i32 = arith.constant 0 : i32
    return %arg0, %arg1 : i32, i32
  }
}

</mosaic_0001>

<llo_original>
// kernel: jordan_cell.1
$region0: #{jordan_cell.1}
  #allocation0 [shape = 'u32[]', space=smem, size = 0x4, offset = 0x4, fixed_abs, tag = 'smem constant byte address 0x4 - core index']
  #allocation1 [shape = 'u32[144,128]{1,0:T(1,128)}', space=vmem, size = 0x12000, scoped, tag = 'internal scratch']
  %s0 = inlined_call_operand.hbm [shape: f32[8,16], index: 0, kind: input, shape index: {}]
  %s1 = inlined_call_operand.hbm [shape: f32[8,16], index: 1, kind: input, shape index: {}]
  %s2 = inlined_call_operand.hbm [shape: f32[16,32], index: 2, kind: input, shape index: {}]
  %s3 = inlined_call_operand.hbm [shape: f32[16,32], index: 3, kind: input, shape index: {}]
  %s4 = inlined_call_operand.vmem [shape: f32[1,32], index: 4, kind: input, shape index: {}]
  %s5 = inlined_call_operand.hbm [shape: f32[8,32], index: 5, kind: output, shape index: {}]
  %s6 = sld [smem:[#allocation0]]
  $region46: #{jordan_cell.1} parent=0
    _
  %s8 = ssub.s32 1, %s6
  %s9 = scalar_select 0, %s8, %s6
  $region1: #{jordan_cell.1} parent=0
    #allocation2 [shape = 'u8[4096]{0}', space=vmem, size = 0x1000, scoped, tag = 'input window, operand 0, single buffered']
    #allocation3 [shape = 's32[1]{0}', space=sflag, size = 0x4, scoped, tag = 'scoped memory for jordan_cell.1']
    #allocation4 [shape = 's32[1]{0}', space=sflag, size = 0x4, scoped, tag = 'scoped memory for jordan_cell.1']
    #allocation5 [shape = 'u8[4096]{0}', space=vmem, size = 0x1000, scoped, tag = 'input window, operand 1, single buffered']
    #allocation6 [shape = 's32[1]{0}', space=sflag, size = 0x4, scoped, tag = 'scoped memory for jordan_cell.1']
    #allocation7 [shape = 'u8[8192]{0}', space=vmem, size = 0x2000, scoped, tag = 'input window, operand 2, single buffered']
    #allocation8 [shape = 'u8[8192]{0}', space=vmem, size = 0x2000, scoped, tag = 'input window, operand 3, single buffered']
    #allocation9 [shape = 's32[1]{0}', space=sflag, size = 0x4, scoped, tag = 'scoped memory for jordan_cell.1']
    #allocation10 [shape = 'u8[4096]{0}', space=vmem, size = 0x1000, scoped, tag = 'output window, operand 0, single buffered']
    %10 = vsyncpa [#allocation3], 0
    %11 = vsyncpa [#allocation6], 0
    %12 = vsyncpa [#allocation9], 0
    %13 = vsyncpa [#allocation4], 0
    // Predicated region
    $region2: #{jordan_cell.1} parent=1 // pred_check
      _
    $region3: #{jordan_cell.1} parent=1 // pred_check_branch
      %15 = sbr.rel (0) target = $region5
    $region4: #{jordan_cell.1} parent=1 // pred_region
      %s17 = ssub.s32 128, 128
      %18 = vsyncadd [#allocation3], %s17
      %s20 = sshll.u32 [#allocation2], 4
      %s21 = int_to_ptr.vmem [resolvable:$true] %s20
      %23 = dma.hbm_to_vmem [thread:$0]  %s0, 128, %s21, [#allocation3]
    $region5: #{jordan_cell.1} parent=1 // pred_fallthru
      _
    // Predicated region
    $region6: #{jordan_cell.1} parent=1 // pred_check
      _
    $region7: #{jordan_cell.1} parent=1 // pred_check_branch
      %25 = sbr.rel (0) target = $region9
    $region8: #{jordan_cell.1} parent=1 // pred_region
      %s27 = ssub.s32 128, 128
      %28 = vsyncadd [#allocation6], %s27
      %s30 = sshll.u32 [#allocation5], 4
      %s31 = int_to_ptr.vmem [resolvable:$true] %s30
      %33 = dma.hbm_to_vmem [thread:$0]  %s1, 128, %s31, [#allocation6]
    $region9: #{jordan_cell.1} parent=1 // pred_fallthru
      _
    // Predicated region
    $region10: #{jordan_cell.1} parent=1 // pred_check
      _
    $region11: #{jordan_cell.1} parent=1 // pred_check_branch
      %35 = sbr.rel (0) target = $region13
    $region12: #{jordan_cell.1} parent=1 // pred_region
      %s37 = ssub.s32 256, 256
      %38 = vsyncadd [#allocation6], %s37
      %s39 = sshll.u32 [#allocation7], 4
      %s40 = int_to_ptr.vmem [resolvable:$true] %s39
      %45 = dma.hbm_to_vmem [thread:$0]  %s2, 256, %s40, [#allocation6], 128, 128, 8
    $region13: #{jordan_cell.1} parent=1 // pred_fallthru
      _
    // Predicated region
    $region14: #{jordan_cell.1} parent=1 // pred_check
      _
    $region15: #{jordan_cell.1} parent=1 // pred_check_branch
      %47 = sbr.rel (0) target = $region17
    $region16: #{jordan_cell.1} parent=1 // pred_region
      %s49 = ssub.s32 256, 256
      %50 = vsyncadd [#allocation9], %s49
      %s51 = sshll.u32 [#allocation8], 4
      %s52 = int_to_ptr.vmem [resolvable:$true] %s51
      %57 = dma.hbm_to_vmem [thread:$0]  %s3, 256, %s52, [#allocation9], 128, 128, 8
    $region17: #{jordan_cell.1} parent=1 // pred_fallthru
      _
    // Predicated region
    $region18: #{jordan_cell.1} parent=1 // pred_check
      _
    $region19: #{jordan_cell.1} parent=1 // pred_check_branch
      %59 = sbr.rel (0) target = $region21
    $region20: #{jordan_cell.1} parent=1 // pred_region
      _
    $region21: #{jordan_cell.1} parent=1 // pred_fallthru
      _
    // Predicated region
    $region22: #{jordan_cell.1} parent=1 // pred_check
      _
    $region23: #{jordan_cell.1} parent=1 // pred_check_branch
      %61 = sbr.rel (0) target = $region25
    $region24: #{jordan_cell.1} parent=1 // pred_region
      %62 = dma.done [#allocation3], 128
    $region25: #{jordan_cell.1} parent=1 // pred_fallthru
      _
    // Predicated region
    $region26: #{jordan_cell.1} parent=1 // pred_check
      _
    $region27: #{jordan_cell.1} parent=1 // pred_check_branch
      %64 = sbr.rel (0) target = $region29
    $region28: #{jordan_cell.1} parent=1 // pred_region
      %65 = dma.done [#allocation6], 128
    $region29: #{jordan_cell.1} parent=1 // pred_fallthru
      _
    // Predicated region
    $region30: #{jordan_cell.1} parent=1 // pred_check
      _
    $region31: #{jordan_cell.1} parent=1 // pred_check_branch
      %67 = sbr.rel (0) target = $region33
    $region32: #{jordan_cell.1} parent=1 // pred_region
      %68 = dma.done [#allocation6], 256
    $region33: #{jordan_cell.1} parent=1 // pred_fallthru
      _
    // Predicated region
    $region34: #{jordan_cell.1} parent=1 // pred_check
      _
    $region35: #{jordan_cell.1} parent=1 // pred_check_branch
      %70 = sbr.rel (0) target = $region37
    $region36: #{jordan_cell.1} parent=1 // pred_region
      %71 = dma.done [#allocation9], 256
    $region37: #{jordan_cell.1} parent=1 // pred_fallthru
      _
    %v72 = vld [vmem:[#allocation2] sm:$0xff]
    %v73 = vld [vmem:[#allocation5] sm:$0xff]
    %v74 = vld [vmem:[#allocation7] sm:$0xff]
    %v75 = vld [vmem:[#allocation7 + $0x8] sm:$0xff]
    %v76 = vld [vmem:[#allocation8] sm:$0xff]
    %v77 = vld [vmem:[#allocation8 + $0x8] sm:$0xff]
    %vm78 = vcmask 130048
    %v80 = vsel %vm78, %v73, 0
    %82 = vmatprep.subr.mxu0 0.0
    %83 = vmatpush1.msra.mxu0 %v76
    %84 = vmatprep.subr.mxu0 0.0
    %85 = vmatpush1.msra.mxu0 %v77
    %86 = vmatprep.subr.mxu0 0.0
    %87 = vmatpush1.msra.mxu0 0.0
    %88 = vmatprep.subr.mxu0 0.0
    %89 = vmatpush1.msra.mxu0 0.0
    %90 = vmatprep.subr.mxu0 0.0
    %91 = vmatpush1.msra.mxu0 0.0
    %92 = vmatprep.subr.mxu0 0.0
    %93 = vmatpush1.msra.mxu0 0.0
    %94 = vmatprep.subr.mxu0 0.0
    %95 = vmatpush1.msra.mxu0 0.0
    %96 = vmatprep.subr.mxu0 0.0
    %97 = vmatpush1.msra.mxu0 0.0
    %98 = vmatprep.subr.mxu0 0.0
    %99 = vmatpush1.msra.mxu0 0.0
    %100 = vmatprep.subr.mxu0 0.0
    %101 = vmatpush1.msra.mxu0 0.0
    %102 = vmatprep.subr.mxu0 0.0
    %103 = vmatpush1.msra.mxu0 0.0
    %104 = vmatprep.subr.mxu0 0.0
    %105 = vmatpush1.msra.mxu0 0.0
    %106 = vmatprep.subr.mxu0 0.0
    %107 = vmatpush1.msra.mxu0 0.0
    %108 = vmatprep.subr.mxu0 0.0
    %109 = vmatpush1.msra.mxu0 0.0
    %110 = vmatprep.subr.mxu0 0.0
    %111 = vmatpush1.msra.mxu0 0.0
    %112 = vmatprep.subr.mxu0 0.0
    %113 = vmatpush1.msra.mxu0 0.0
    %114 = vmatprep.subr.mxu0 0.0
    %115 = vmatpush1.msra.mxu0 0.0
    %116 = vmatprep.subr.mxu0 0.0
    %117 = vmatpush1.msra.mxu0 0.0
    %118 = vmatprep.subr.mxu0 0.0
    %119 = vmatpush1.msra.mxu0 0.0
    %120 = vmatprep.subr.mxu0 0.0
    %121 = vmatpush1.msra.mxu0 0.0
    %122 = vmatprep.subr.mxu0 0.0
    %123 = vmatpush1.msra.mxu0 0.0
    %124 = vmatprep.subr.mxu0 0.0
    %125 = vmatpush1.msra.mxu0 0.0
    %126 = vmatprep.subr.mxu0 0.0
    %127 = vmatpush1.msra.mxu0 0.0
    %128 = vmatprep.subr.mxu0 0.0
    %129 = vmatpush1.msra.mxu0 0.0
    %130 = vmatprep.subr.mxu0 0.0
    %131 = vmatpush1.msra.mxu0 0.0
    %132 = vmatprep.subr.mxu0 0.0
    %133 = vmatpush1.msra.mxu0 0.0
    %134 = vmatprep.subr.mxu0 0.0
    %135 = vmatpush1.msra.mxu0 0.0
    %136 = vmatprep.subr.mxu0 0.0
    %137 = vmatpush1.msra.mxu0 0.0
    %138 = vmatprep.subr.mxu0 0.0
    %139 = vmatpush1.msra.mxu0 0.0
    %140 = vmatprep.subr.mxu0 0.0
    %141 = vmatpush1.msra.mxu0 0.0
    %142 = vmatprep.subr.mxu0 0.0
    %143 = vmatpush1.msra.mxu0 0.0
    %144 = vmatprep.subr.mxu0 0.0
    %145 = vmatpush1.msra.mxu0 0.0
    %146 = vmatprep.mubr.f32.mxu0 0.0
    %147 = vmatmul.mubr.f32.gmra.mrb[0].mxu0 %v80
    %v148 = vpop.f32.mrb[0].mxu0
    %v149 = vadd.f32 0.0, %v148
    %v150 = vpop.f32.mrb[0].mxu0
    %151 = vdwg.mxu0
    %v153 = vsel %vm78, %v72, 0
    %155 = vmatprep.subr.mxu0 0.0
    %156 = vmatpush1.msra.mxu0 %v74
    %157 = vmatprep.subr.mxu0 0.0
    %158 = vmatpush1.msra.mxu0 %v75
    %159 = vmatprep.subr.mxu0 0.0
    %160 = vmatpush1.msra.mxu0 0.0
    %161 = vmatprep.subr.mxu0 0.0
    %162 = vmatpush1.msra.mxu0 0.0
    %163 = vmatprep.subr.mxu0 0.0
    %164 = vmatpush1.msra.mxu0 0.0
    %165 = vmatprep.subr.mxu0 0.0
    %166 = vmatpush1.msra.mxu0 0.0
    %167 = vmatprep.subr.mxu0 0.0
    %168 = vmatpush1.msra.mxu0 0.0
    %169 = vmatprep.subr.mxu0 0.0
    %170 = vmatpush1.msra.mxu0 0.0
    %171 = vmatprep.subr.mxu0 0.0
    %172 = vmatpush1.msra.mxu0 0.0
    %173 = vmatprep.subr.mxu0 0.0
    %174 = vmatpush1.msra.mxu0 0.0
    %175 = vmatprep.subr.mxu0 0.0
    %176 = vmatpush1.msra.mxu0 0.0
    %177 = vmatprep.subr.mxu0 0.0
    %178 = vmatpush1.msra.mxu0 0.0
    %179 = vmatprep.subr.mxu0 0.0
    %180 = vmatpush1.msra.mxu0 0.0
    %181 = vmatprep.subr.mxu0 0.0
    %182 = vmatpush1.msra.mxu0 0.0
    %183 = vmatprep.subr.mxu0 0.0
    %184 = vmatpush1.msra.mxu0 0.0
    %185 = vmatprep.subr.mxu0 0.0
    %186 = vmatpush1.msra.mxu0 0.0
    %187 = vmatprep.subr.mxu0 0.0
    %188 = vmatpush1.msra.mxu0 0.0
    %189 = vmatprep.subr.mxu0 0.0
    %190 = vmatpush1.msra.mxu0 0.0
    %191 = vmatprep.subr.mxu0 0.0
    %192 = vmatpush1.msra.mxu0 0.0
    %193 = vmatprep.subr.mxu0 0.0
    %194 = vmatpush1.msra.mxu0 0.0
    %195 = vmatprep.subr.mxu0 0.0
    %196 = vmatpush1.msra.mxu0 0.0
    %197 = vmatprep.subr.mxu0 0.0
    %198 = vmatpush1.msra.mxu0 0.0
    %199 = vmatprep.subr.mxu0 0.0
    %200 = vmatpush1.msra.mxu0 0.0
    %201 = vmatprep.subr.mxu0 0.0
    %202 = vmatpush1.msra.mxu0 0.0
    %203 = vmatprep.subr.mxu0 0.0
    %204 = vmatpush1.msra.mxu0 0.0
    %205 = vmatprep.subr.mxu0 0.0
    %206 = vmatpush1.msra.mxu0 0.0
    %207 = vmatprep.subr.mxu0 0.0
    %208 = vmatpush1.msra.mxu0 0.0
    %209 = vmatprep.subr.mxu0 0.0
    %210 = vmatpush1.msra.mxu0 0.0
    %211 = vmatprep.subr.mxu0 0.0
    %212 = vmatpush1.msra.mxu0 0.0
    %213 = vmatprep.subr.mxu0 0.0
    %214 = vmatpush1.msra.mxu0 0.0
    %215 = vmatprep.subr.mxu0 0.0
    %216 = vmatpush1.msra.mxu0 0.0
    %217 = vmatprep.subr.mxu0 0.0
    %218 = vmatpush1.msra.mxu0 0.0
    %219 = vmatprep.mubr.f32.mxu0 0.0
    %220 = vmatmul.mubr.f32.gmra.mrb[0].mxu0 %v153
    %v221 = vpop.f32.mrb[0].mxu0
    %v222 = vadd.f32 %v149, %v221
    %v223 = vpop.f32.mrb[0].mxu0
    %224 = vdwg.mxu0
    %v225 = vld [vmem:[%s4] sm:$0x1]
    %v227 = vlaneseq
    %v228 = vshrl.u32 %v227, 7
    %v229 = vsub.s32 0, %v228
    %v230 = vrot.slane %v225, %v229
    %v232 = vadd.f32 %v222, %v230
    %v233 = vxor.u32 %v232, 2147483648
    %v234 = vmul.f32 %v233, 1.442695
    %v235 = vpow.pop %v234
    %v236 = vadd.f32 %v235, 1.0
    %v237 = vrcp.pop %v236
    %v238 = vmul.f32 1.0, %v237
    %vm239 = vcmask 261120
    %240 = vst.msk [vmem:[#allocation10] sm:$0xff] %vm239, %v238
    // Predicated region
    $region38: #{jordan_cell.1} parent=1 // pred_check
      _
    $region39: #{jordan_cell.1} parent=1 // pred_check_branch
      %242 = sbr.rel (0) target = $region41
    $region40: #{jordan_cell.1} parent=1 // pred_region
      %s244 = ssub.s32 128, 128
      %245 = vsyncadd [#allocation4], %s244
      %s247 = sshll.u32 [#allocation10], 4
      %s248 = int_to_ptr.vmem [resolvable:$true] %s247
      %250 = dma.vmem_to_hbm [thread:$0]  %s248, 128, %s5, [#allocation4]
    $region41: #{jordan_cell.1} parent=1 // pred_fallthru
      _
    // Predicated region
    $region42: #{jordan_cell.1} parent=1 // pred_check
      _
    $region43: #{jordan_cell.1} parent=1 // pred_check_branch
      %252 = sbr.rel (0) target = $region45
    $region44: #{jordan_cell.1} parent=1 // pred_region
      %253 = dma.done [#allocation4], 128
    $region45: #{jordan_cell.1} parent=1 // pred_fallthru
      _
    %254 = vsyncpa [#allocation3], 1
    %255 = vsyncpa [#allocation6], 1
    %256 = vsyncpa [#allocation9], 1
    %257 = vsyncpa [#allocation4], 1

</llo_original>
